<compile_context>
chip_gen: v7x
topology: tpu7x:2x2x1
jax: 0.10.0
libtpu: 0.0.40
codegen_flags: <defaults>
</compile_context>

<pallas_src>
import functools

import jax
import jax.numpy as jnp
from jax import lax
from jax.experimental import pallas as pl
from jax.experimental.pallas import tpu as pltpu


def _round_up(x: int, m: int) -> int:
    return ((x + m - 1) // m) * m


def _vmem_budget_bytes() -> int:
    """Per-generation VMEM budget, leaving headroom for compiler scratch."""
    try:
        cap = int(getattr(pltpu.get_tpu_info(), "vmem_capacity_bytes", 64 << 20))
    except Exception:
        cap = 64 << 20  # conservative (v7x-sized) default if the query fails
    if cap >= (128 << 20):        # v5e / v6e: 128 MiB physical VMEM per core
        return 100 << 20
    # v7x: 64 MiB physical — leave ~12 MiB headroom for internal scratch/semaphores
    return max(min(cap - (12 << 20), 52 << 20), 24 << 20)


def _pick_tile(size: int, target: int, align: int):
    """Return (tile, padded_size): tile divides padded_size, both multiples of align.

    Prefers a tile that divides the (alignment-padded) size so no materialized
    jnp.pad copy is needed; only falls back to padding up to the target tile when
    no reasonably large divisor exists.
    """
    padded = _round_up(size, align)
    target = max(align, (target // align) * align)
    if padded <= target:
        return padded, padded
    floor = max(align, (target // 2 // align) * align)
    t = target
    while t >= floor:
        if padded % t == 0:
            return t, padded
        t -= align
    # TODO(synk): rely on Pallas masked boundary blocks instead of a padded copy.
    return target, _round_up(padded, target)


def _spec(shape, index_map, single_buffer=False):
    """BlockSpec; single_buffer=True for operands whose block index never changes."""
    if single_buffer:
        return pl.BlockSpec(shape, index_map, pipeline_mode=pl.Buffered(1))
    return pl.BlockSpec(shape, index_map)


def _dense_gelu_kernel(x_ref, w_ref, b_ref, o_ref, *, n_chunks, approximate):
    # x_ref: (tm, E), w_ref: (E, tn), b_ref: (1, tn), o_ref: (tm, tn)
    x = x_ref[...]
    tn = o_ref.shape[-1]
    chunk = tn // n_chunks
    # Static column-chunk loop: GELU (VPU) of chunk c co-issues with the MXU
    # matmul of chunk c+1 instead of serializing on the whole tile.
    for c in range(n_chunks):
        cols = pl.ds(c * chunk, chunk)
        acc = jnp.dot(x, w_ref[:, cols], preferred_element_type=jnp.float32)
        acc = acc + b_ref[:, cols].astype(jnp.float32)
        if approximate:
            # tanh approximation: runs in the EUP slot (cheaper, ~1e-3 deviation).
            y = jax.nn.gelu(acc, approximate=True)
        else:
            # Exact GELU — matches torch.nn.GELU() default (approximate='none').
            inv_sqrt2 = jnp.float32(0.7071067811865476)
            y = 0.5 * acc * (1.0 + lax.erf(acc * inv_sqrt2))
        o_ref[:, cols] = y.astype(o_ref.dtype)


@functools.partial(
    jax.jit,
    static_argnames=("tm", "tn", "out_dtype", "approximate", "single_buffer_resident"),
)
def _bert_intermediate_impl(x, w, b, *, tm, tn, out_dtype, approximate,
                            single_buffer_resident):
    B, S, E = x.shape
    Ew, I = w.shape
    assert Ew == E, "weight must be (emb_size, intermediate_size)"
    out_dtype = jnp.dtype(out_dtype)

    M = B * S
    x2d = x.reshape(M, E)

    x_isize = jnp.dtype(x.dtype).itemsize
    w_isize = jnp.dtype(w.dtype).itemsize
    o_isize = out_dtype.itemsize
    sub = max(8, 32 // x_isize)  # sublane multiple for the M axis (8 f32 / 16 bf16)

    # ---- tiling of M (prefer divisor tiles -> no pad copy) ----
    tm_eff, Mp = _pick_tile(M, tm, sub)
    nm = Mp // tm_eff

    budget = _vmem_budget_bytes()
    Ip_full = _round_up(I, 128)

    # ---- full weight residency check ----
    resident_bytes = (E * Ip_full * w_isize              # W, single-buffered
                      + 8 * Ip_full * 4                  # bias (8-sublane padded)
                      + 2 * tm_eff * E * x_isize         # double-buffered x tile
                      + 2 * tm_eff * Ip_full * o_isize)  # double-buffered out tile
    weight_resident = (resident_bytes + (2 << 20)) <= budget

    if weight_resident:
        tn_eff = Ip = Ip_full
        ni = 1
    else:
        tn_eff, Ip = _pick_tile(I, tn, 128)
        ni = Ip // tn_eff

    # ---- minimal padding, only when the tiling does not divide the shapes ----
    if Mp != M:
        x2d = jnp.pad(x2d, ((0, Mp - M), (0, 0)))
    if Ip != I:
        w = jnp.pad(w, ((0, 0), (0, Ip - I)))
        b = jnp.pad(b, (0, Ip - I))
    b2d = b.reshape(1, Ip)

    # ---- in-kernel column chunking (chunks stay multiples of 128 lanes) ----
    n_chunks = 1
    for cand in (4, 2):
        if tn_eff % cand == 0 and (tn_eff // cand) % 128 == 0:
            n_chunks = cand
            break

    kernel = functools.partial(_dense_gelu_kernel, n_chunks=n_chunks,
                               approximate=approximate)

    if weight_resident:
        # 1-D grid over M tiles; W and bias block indices never change, so they
        # are DMA'd from HBM exactly once (and single-buffered when supported).
        # Note (v7x): both TCs shard the parallel M axis; each loads W once,
        # which is still far below the nm-fold re-stream it replaces.
        grid = (nm,)
        x_spec = pl.BlockSpec((tm_eff, E), lambda i: (i, 0))
        w_spec = _spec((E, Ip), lambda i: (0, 0), single_buffer_resident)
        b_spec = _spec((1, Ip), lambda i: (0, 0), single_buffer_resident)
        o_spec = pl.BlockSpec((tm_eff, Ip), lambda i: (i, 0))
        dims = ("parallel",)
        step_bytes = resident_bytes
    else:
        # 2-D grid: pick the order that minimizes *redundant* HBM traffic.
        redundant_w = (nm - 1) * E * Ip * w_isize   # x-resident order re-streams W
        redundant_x = (ni - 1) * Mp * E * x_isize   # w-resident order re-streams x
        if redundant_w <= redundant_x:
            grid = (nm, ni)                          # x block resident across inner axis
            x_spec = pl.BlockSpec((tm_eff, E), lambda i, j: (i, 0))
            w_spec = pl.BlockSpec((E, tn_eff), lambda i, j: (0, j))
            b_spec = pl.BlockSpec((1, tn_eff), lambda i, j: (0, j))
            o_spec = pl.BlockSpec((tm_eff, tn_eff), lambda i, j: (i, j))
        else:
            grid = (ni, nm)                          # w block resident across inner axis
            x_spec = pl.BlockSpec((tm_eff, E), lambda j, i: (i, 0))
            w_spec = pl.BlockSpec((E, tn_eff), lambda j, i: (0, j))
            b_spec = pl.BlockSpec((1, tn_eff), lambda j, i: (0, j))
            o_spec = pl.BlockSpec((tm_eff, tn_eff), lambda j, i: (i, j))
        dims = ("parallel", "parallel")
        step_bytes = 2 * (tm_eff * E * x_isize + E * tn_eff * w_isize
                          + 8 * tn_eff * 4 + tm_eff * tn_eff * o_isize)

    vmem_limit = int(min(budget, max(step_bytes + (4 << 20), 32 << 20)))

    cost = pl.CostEstimate(
        flops=2 * M * E * I,
        transcendentals=M * I,
        bytes_accessed=(M * E * x_isize + E * I * w_isize
                        + I * jnp.dtype(b.dtype).itemsize + M * I * o_isize),
    )

    out2d = pl.pallas_call(
        kernel,
        out_shape=jax.ShapeDtypeStruct((Mp, Ip), out_dtype),
        grid_spec=pltpu.PrefetchScalarGridSpec(
            num_scalar_prefetch=0,
            grid=grid,
            in_specs=[x_spec, w_spec, b_spec],
            out_specs=o_spec,
        ),
        compiler_params=pltpu.CompilerParams(
            dimension_semantics=dims,
            vmem_limit_bytes=vmem_limit,
        ),
        cost_estimate=cost,
    )(x2d, w, b2d)

    if Mp != M or Ip != I:
        out2d = out2d[:M, :I]
    return out2d.reshape(B, S, I)


def bert_intermediate(x, w, b, *, tm=256, tn=512, out_dtype=None, approximate=False):
    """x: (B, S, E), w: (E, I), b: (I,) -> gelu(x @ w + b), shape (B, S, I).

    Pass bf16 x/w (cast weights once at parameter load) for the bf16 MXU path;
    set out_dtype=jnp.bfloat16 to halve output HBM traffic when the consumer
    accepts bf16. Accumulation / bias / GELU stay in f32 inside the kernel.
    """
    if out_dtype is None:
        out_dtype = x.dtype
    out_dtype = jnp.dtype(out_dtype).name
    try:
        return _bert_intermediate_impl(
            x, w, b, tm=tm, tn=tn, out_dtype=out_dtype,
            approximate=approximate, single_buffer_resident=True)
    except Exception:
        # pl.Buffered(1) on the resident operands is purely a VMEM-footprint
        # optimization; fall back to default double-buffering if rejected.
        return _bert_intermediate_impl(
            x, w, b, tm=tm, tn=tn, out_dtype=out_dtype,
            approximate=approximate, single_buffer_resident=False)


def _reference(x, w, b):
    y = jnp.einsum("bse,ei->bsi", x, w) + b
    return 0.5 * y * (1.0 + lax.erf(y / jnp.sqrt(2.0)))


if __name__ == "__main__":
    key = jax.random.PRNGKey(0)

    # Primary config: emb_size=32, intermediate_size=128; batch=2, seq=8.
    B, S, E, I = 2, 8, 32, 128
    kx, kw, kb, k2 = jax.random.split(key, 4)
    x = jax.random.normal(kx, (B, S, E), dtype=jnp.float32)
    w = jax.random.normal(kw, (E, I), dtype=jnp.float32) * (1.0 / jnp.sqrt(E))
    b = jax.random.normal(kb, (I,), dtype=jnp.float32) * 0.01

    out = bert_intermediate(x, w, b)
    jax.block_until_ready(out)
    ref = _reference(x, w, b)
    assert out.shape == (B, S, I)
    assert jnp.allclose(out, ref, atol=1e-5, rtol=1e-5)

    # Second check: shapes NOT divisible by the tiling (exercises the pad path).
    B2, S2, E2, I2 = 3, 5, 32, 200
    kx2, kw2, kb2 = jax.random.split(k2, 3)
    x2 = jax.random.normal(kx2, (B2, S2, E2), dtype=jnp.float32)
    w2 = jax.random.normal(kw2, (E2, I2), dtype=jnp.float32) * (1.0 / jnp.sqrt(E2))
    b2 = jax.random.normal(kb2, (I2,), dtype=jnp.float32) * 0.01

    out2 = bert_intermediate(x2, w2, b2)
    jax.block_until_ready(out2)
    ref2 = _reference(x2, w2, b2)
    assert out2.shape == (B2, S2, I2)
    assert jnp.allclose(out2, ref2, atol=1e-5, rtol=1e-5)

    print("KERNEL_OK")
</pallas_src>

<mosaic_0001>
module attributes {stable_mosaic.version = 11 : i64} {
  func.func @_dense_gelu_kernel(%arg0: i32, %arg1: memref<16x32xf32, #tpu.memory_space<vmem>>, %arg2: memref<32x128xf32, #tpu.memory_space<vmem>>, %arg3: memref<1x128xf32, #tpu.memory_space<vmem>>, %arg4: memref<16x128xf32, #tpu.memory_space<vmem>>) attributes {dimension_semantics = [#tpu.dimension_semantics<parallel>], iteration_bounds = array<i64: 1>, scalar_prefetch = 0 : i64, scratch_operands = 0 : i64, tpu.core_type = #tpu.core_type<tc>, window_params = [{transform_indices = @transform_0, window_bounds = array<i64: 16, 32>}, {pipeline_mode = #tpu.pipeline_mode<synchronous>, transform_indices = @transform_1, window_bounds = array<i64: 32, 128>}, {pipeline_mode = #tpu.pipeline_mode<synchronous>, transform_indices = @transform_2, window_bounds = array<i64: 1, 128>}, {transform_indices = @transform_3, window_bounds = array<i64: 16, 128>}]} {
    %c0 = arith.constant 0 : index
    %c0_0 = arith.constant 0 : index
    %0 = vector.load %arg1[%c0, %c0_0] : memref<16x32xf32, #tpu.memory_space<vmem>>, vector<16x32xf32>
    %c0_1 = arith.constant 0 : index
    %c0_2 = arith.constant 0 : index
    %1 = vector.load %arg2[%c0_1, %c0_2] : memref<32x128xf32, #tpu.memory_space<vmem>>, vector<32x128xf32>
    %cst = arith.constant dense<0.000000e+00> : vector<16x128xf32>
    %2 = tpu.matmul %0, %1, %cst {dimension_numbers = #tpu.dot_dimension_numbers<[1], [0], [0], [1], [0, 0, 1, 1], [], []>} : vector<16x32xf32>, vector<32x128xf32>, vector<16x128xf32> -> vector<16x128xf32>
    %c0_3 = arith.constant 0 : index
    %c0_4 = arith.constant 0 : index
    %3 = vector.load %arg3[%c0_3, %c0_4] : memref<1x128xf32, #tpu.memory_space<vmem>>, vector<1x128xf32>
    %4 = vector.broadcast %3 : vector<1x128xf32> to vector<16x128xf32>
    %5 = arith.addf %2, %4 : vector<16x128xf32>
    %cst_5 = arith.constant 5.000000e-01 : f32
    %6 = vector.broadcast %cst_5 : f32 to vector<16x128xf32>
    %7 = arith.mulf %6, %5 : vector<16x128xf32>
    %cst_6 = arith.constant 0.707106769 : f32
    %8 = vector.broadcast %cst_6 : f32 to vector<16x128xf32>
    %9 = arith.mulf %5, %8 : vector<16x128xf32>
    %10 = math.erf %9 : vector<16x128xf32>
    %cst_7 = arith.constant 1.000000e+00 : f32
    %11 = vector.broadcast %cst_7 : f32 to vector<16x128xf32>
    %12 = arith.addf %11, %10 : vector<16x128xf32>
    %13 = arith.mulf %7, %12 : vector<16x128xf32>
    %c0_8 = arith.constant 0 : index
    %c0_9 = arith.constant 0 : index
    %14 = vector.load %arg4[%c0_8, %c0_9] : memref<16x128xf32, #tpu.memory_space<vmem>>, vector<16x128xf32>
    tpu.vector_store %arg4[%c0_8, %c0_9], %13 {strides = array<i32>} : memref<16x128xf32, #tpu.memory_space<vmem>>, vector<16x128xf32>,
    return
  }
  func.func @transform_0(%arg0: i32) -> (i32, i32) {
    %c0_i32 = arith.constant 0 : i32
    %c0_i32_0 = arith.constant 0 : i32
    return %arg0, %c0_i32 : i32, i32
  }
  func.func @transform_1(%arg0: i32) -> (i32, i32) {
    %c0_i32 = arith.constant 0 : i32
    %c0_i32_0 = arith.constant 0 : i32
    %c0_i32_1 = arith.constant 0 : i32
    return %c0_i32, %c0_i32_0 : i32, i32
  }
  func.func @transform_2(%arg0: i32) -> (i32, i32) {
    %c0_i32 = arith.constant 0 : i32
    %c0_i32_0 = arith.constant 0 : i32
    %c0_i32_1 = arith.constant 0 : i32
    return %c0_i32, %c0_i32_0 : i32, i32
  }
  func.func @transform_3(%arg0: i32) -> (i32, i32) {
    %c0_i32 = arith.constant 0 : i32
    %c0_i32_0 = arith.constant 0 : i32
    return %arg0, %c0_i32 : i32, i32
  }
}

module attributes {stable_mosaic.version = 11 : i64} {
  func.func @_dense_gelu_kernel(%arg0: i32, %arg1: memref<16x32xf32, #tpu.memory_space<vmem>>, %arg2: memref<32x128xf32, #tpu.memory_space<vmem>>, %arg3: memref<1x128xf32, #tpu.memory_space<vmem>>, %arg4: memref<16x128xf32, #tpu.memory_space<vmem>>) attributes {dimension_semantics = [#tpu.dimension_semantics<parallel>], iteration_bounds = array<i64: 1>, scalar_prefetch = 0 : i64, scratch_operands = 0 : i64, tpu.core_type = #tpu.core_type<tc>, window_params = [{transform_indices = @transform_0, window_bounds = array<i64: 16, 32>}, {pipeline_mode = #tpu.pipeline_mode<synchronous>, transform_indices = @transform_1, window_bounds = array<i64: 32, 128>}, {pipeline_mode = #tpu.pipeline_mode<synchronous>, transform_indices = @transform_2, window_bounds = array<i64: 1, 128>}, {transform_indices = @transform_3, window_bounds = array<i64: 16, 128>}]} {
    %c0 = arith.constant 0 : index
    %c0_0 = arith.constant 0 : index
    %0 = vector.load %arg1[%c0, %c0_0] : memref<16x32xf32, #tpu.memory_space<vmem>>, vector<16x32xf32>
    %c0_1 = arith.constant 0 : index
    %c0_2 = arith.constant 0 : index
    %1 = vector.load %arg2[%c0_1, %c0_2] : memref<32x128xf32, #tpu.memory_space<vmem>>, vector<32x128xf32>
    %cst = arith.constant dense<0.000000e+00> : vector<16x128xf32>
    %2 = tpu.matmul %0, %1, %cst {dimension_numbers = #tpu.dot_dimension_numbers<[1], [0], [0], [1], [0, 0, 1, 1], [], []>} : vector<16x32xf32>, vector<32x128xf32>, vector<16x128xf32> -> vector<16x128xf32>
    %c0_3 = arith.constant 0 : index
    %c0_4 = arith.constant 0 : index
    %3 = vector.load %arg3[%c0_3, %c0_4] : memref<1x128xf32, #tpu.memory_space<vmem>>, vector<1x128xf32>
    %4 = vector.broadcast %3 : vector<1x128xf32> to vector<16x128xf32>
    %5 = arith.addf %2, %4 : vector<16x128xf32>
    %cst_5 = arith.constant 5.000000e-01 : f32
    %6 = vector.broadcast %cst_5 : f32 to vector<16x128xf32>
    %7 = arith.mulf %6, %5 : vector<16x128xf32>
    %cst_6 = arith.constant 0.707106769 : f32
    %8 = vector.broadcast %cst_6 : f32 to vector<16x128xf32>
    %9 = arith.mulf %5, %8 : vector<16x128xf32>
    %10 = math.erf %9 : vector<16x128xf32>
    %cst_7 = arith.constant 1.000000e+00 : f32
    %11 = vector.broadcast %cst_7 : f32 to vector<16x128xf32>
    %12 = arith.addf %11, %10 : vector<16x128xf32>
    %13 = arith.mulf %7, %12 : vector<16x128xf32>
    %c0_8 = arith.constant 0 : index
    %c0_9 = arith.constant 0 : index
    %14 = vector.load %arg4[%c0_8, %c0_9] : memref<16x128xf32, #tpu.memory_space<vmem>>, vector<16x128xf32>
    tpu.vector_store %arg4[%c0_8, %c0_9], %13 {strides = array<i32>} : memref<16x128xf32, #tpu.memory_space<vmem>>, vector<16x128xf32>,
    return
  }
  func.func @transform_0(%arg0: i32) -> (i32, i32) {
    %c0_i32 = arith.constant 0 : i32
    %c0_i32_0 = arith.constant 0 : i32
    return %arg0, %c0_i32 : i32, i32
  }
  func.func @transform_1(%arg0: i32) -> (i32, i32) {
    %c0_i32 = arith.constant 0 : i32
    %c0_i32_0 = arith.constant 0 : i32
    %c0_i32_1 = arith.constant 0 : i32
    return %c0_i32, %c0_i32_0 : i32, i32
  }
  func.func @transform_2(%arg0: i32) -> (i32, i32) {
    %c0_i32 = arith.constant 0 : i32
    %c0_i32_0 = arith.constant 0 : i32
    %c0_i32_1 = arith.constant 0 : i32
    return %c0_i32, %c0_i32_0 : i32, i32
  }
  func.func @transform_3(%arg0: i32) -> (i32, i32) {
    %c0_i32 = arith.constant 0 : i32
    %c0_i32_0 = arith.constant 0 : i32
    return %arg0, %c0_i32 : i32, i32
  }
}

</mosaic_0001>

<llo_original>
// kernel: _bert_intermediate_impl.1
$region0: #{_bert_intermediate_impl.1}
  #allocation0 [shape = 'u32[]', space=smem, size = 0x4, offset = 0x4, fixed_abs, tag = 'smem constant byte address 0x4 - core index']
  #allocation1 [shape = 'u32[144,128]{1,0:T(1,128)}', space=vmem, size = 0x12000, scoped, tag = 'internal scratch']
  %s0 = inlined_call_operand.hbm [shape: f32[16,32], index: 0, kind: input, shape index: {}]
  %s1 = inlined_call_operand.hbm [shape: f32[32,128], index: 1, kind: input, shape index: {}]
  %s2 = inlined_call_operand.vmem [shape: f32[1,128], index: 2, kind: input, shape index: {}]
  %s3 = inlined_call_operand.hbm [shape: f32[16,128], index: 3, kind: output, shape index: {}]
  %s4 = sld [smem:[#allocation0]]
  $region30: #{_bert_intermediate_impl.1} parent=0
    _
  %s6 = ssub.s32 1, %s4
  %s7 = scalar_select 0, %s6, %s4
  $region1: #{_bert_intermediate_impl.1} parent=0
    #allocation2 [shape = 'u8[8192]{0}', space=vmem, size = 0x2000, scoped, tag = 'input window, operand 0, single buffered']
    #allocation3 [shape = 's32[1]{0}', space=sflag, size = 0x4, scoped, tag = 'scoped memory for _bert_intermediate_impl.1']
    #allocation4 [shape = 's32[1]{0}', space=sflag, size = 0x4, scoped, tag = 'scoped memory for _bert_intermediate_impl.1']
    #allocation5 [shape = 'u8[16384]{0}', space=vmem, size = 0x4000, scoped, tag = 'input window, operand 1, single buffered']
    #allocation6 [shape = 's32[1]{0}', space=sflag, size = 0x4, scoped, tag = 'scoped memory for _bert_intermediate_impl.1']
    #allocation7 [shape = 'u8[8192]{0}', space=vmem, size = 0x2000, scoped, tag = 'output window, operand 0, single buffered']
    %8 = vsyncpa [#allocation3], 0
    %9 = vsyncpa [#allocation6], 0
    %10 = vsyncpa [#allocation4], 0
    // Predicated region
    $region2: #{_bert_intermediate_impl.1} parent=1 // pred_check
      _
    $region3: #{_bert_intermediate_impl.1} parent=1 // pred_check_branch
      %12 = sbr.rel (0) target = $region5
    $region4: #{_bert_intermediate_impl.1} parent=1 // pred_region
      %s14 = ssub.s32 256, 256
      %15 = vsyncadd [#allocation3], %s14
      %s16 = sshll.u32 [#allocation2], 4
      %s17 = int_to_ptr.vmem [resolvable:$true] %s16
      %22 = dma.hbm_to_vmem [thread:$0]  %s0, 256, %s17, [#allocation3], 128, 128, 8
    $region5: #{_bert_intermediate_impl.1} parent=1 // pred_fallthru
      _
    // Predicated region
    $region6: #{_bert_intermediate_impl.1} parent=1 // pred_check
      _
    $region7: #{_bert_intermediate_impl.1} parent=1 // pred_check_branch
      %24 = sbr.rel (0) target = $region9
    $region8: #{_bert_intermediate_impl.1} parent=1 // pred_region
      %s26 = ssub.s32 512, 512
      %27 = vsyncadd [#allocation6], %s26
      %s28 = sshll.u32 [#allocation5], 4
      %s29 = int_to_ptr.vmem [resolvable:$true] %s28
      %34 = dma.hbm_to_vmem [thread:$0]  %s1, 512, %s29, [#allocation6], 128, 128, 8
    $region9: #{_bert_intermediate_impl.1} parent=1 // pred_fallthru
      _
    // Predicated region
    $region10: #{_bert_intermediate_impl.1} parent=1 // pred_check
      _
    $region11: #{_bert_intermediate_impl.1} parent=1 // pred_check_branch
      %36 = sbr.rel (0) target = $region13
    $region12: #{_bert_intermediate_impl.1} parent=1 // pred_region
      _
    $region13: #{_bert_intermediate_impl.1} parent=1 // pred_fallthru
      _
    // Predicated region
    $region14: #{_bert_intermediate_impl.1} parent=1 // pred_check
      _
    $region15: #{_bert_intermediate_impl.1} parent=1 // pred_check_branch
      %38 = sbr.rel (0) target = $region17
    $region16: #{_bert_intermediate_impl.1} parent=1 // pred_region
      %39 = dma.done [#allocation3], 256
    $region17: #{_bert_intermediate_impl.1} parent=1 // pred_fallthru
      _
    // Predicated region
    $region18: #{_bert_intermediate_impl.1} parent=1 // pred_check
      _
    $region19: #{_bert_intermediate_impl.1} parent=1 // pred_check_branch
      %41 = sbr.rel (0) target = $region21
    $region20: #{_bert_intermediate_impl.1} parent=1 // pred_region
      %42 = dma.done [#allocation6], 512
    $region21: #{_bert_intermediate_impl.1} parent=1 // pred_fallthru
      _
    %v43 = vld [vmem:[#allocation2] sm:$0xff]
    %v44 = vld [vmem:[#allocation2 + $0x8] sm:$0xff]
    %v45 = vld [vmem:[#allocation5] sm:$0xff]
    %v46 = vld [vmem:[#allocation5 + $0x8] sm:$0xff]
    %v47 = vld [vmem:[#allocation5 + $0x10] sm:$0xff]
    %v48 = vld [vmem:[#allocation5 + $0x18] sm:$0xff]
    %v49 = vld [vmem:[%s2] sm:$0x1]
    %v51 = vlaneseq
    %v52 = vshrl.u32 %v51, 7
    %v53 = vsub.s32 0, %v52
    %v54 = vrot.slane %v49, %v53
    %vm56 = vcmask 261120
    %v58 = vsel %vm56, %v43, 0
    %v61 = vsel %vm56, %v44, 0
    %63 = vmatprep.subr.mxu0 0.0
    %64 = vmatpush1.msra.mxu0 %v45
    %65 = vmatprep.subr.mxu0 0.0
    %66 = vmatpush1.msra.mxu0 %v46
    %67 = vmatprep.subr.mxu0 0.0
    %68 = vmatpush1.msra.mxu0 %v47
    %69 = vmatprep.subr.mxu0 0.0
    %70 = vmatpush1.msra.mxu0 %v48
    %71 = vmatprep.subr.mxu0 0.0
    %72 = vmatpush1.msra.mxu0 0.0
    %73 = vmatprep.subr.mxu0 0.0
    %74 = vmatpush1.msra.mxu0 0.0
    %75 = vmatprep.subr.mxu0 0.0
    %76 = vmatpush1.msra.mxu0 0.0
    %77 = vmatprep.subr.mxu0 0.0
    %78 = vmatpush1.msra.mxu0 0.0
    %79 = vmatprep.subr.mxu0 0.0
    %80 = vmatpush1.msra.mxu0 0.0
    %81 = vmatprep.subr.mxu0 0.0
    %82 = vmatpush1.msra.mxu0 0.0
    %83 = vmatprep.subr.mxu0 0.0
    %84 = vmatpush1.msra.mxu0 0.0
    %85 = vmatprep.subr.mxu0 0.0
    %86 = vmatpush1.msra.mxu0 0.0
    %87 = vmatprep.subr.mxu0 0.0
    %88 = vmatpush1.msra.mxu0 0.0
    %89 = vmatprep.subr.mxu0 0.0
    %90 = vmatpush1.msra.mxu0 0.0
    %91 = vmatprep.subr.mxu0 0.0
    %92 = vmatpush1.msra.mxu0 0.0
    %93 = vmatprep.subr.mxu0 0.0
    %94 = vmatpush1.msra.mxu0 0.0
    %95 = vmatprep.subr.mxu0 0.0
    %96 = vmatpush1.msra.mxu0 0.0
    %97 = vmatprep.subr.mxu0 0.0
    %98 = vmatpush1.msra.mxu0 0.0
    %99 = vmatprep.subr.mxu0 0.0
    %100 = vmatpush1.msra.mxu0 0.0
    %101 = vmatprep.subr.mxu0 0.0
    %102 = vmatpush1.msra.mxu0 0.0
    %103 = vmatprep.subr.mxu0 0.0
    %104 = vmatpush1.msra.mxu0 0.0
    %105 = vmatprep.subr.mxu0 0.0
    %106 = vmatpush1.msra.mxu0 0.0
    %107 = vmatprep.subr.mxu0 0.0
    %108 = vmatpush1.msra.mxu0 0.0
    %109 = vmatprep.subr.mxu0 0.0
    %110 = vmatpush1.msra.mxu0 0.0
    %111 = vmatprep.subr.mxu0 0.0
    %112 = vmatpush1.msra.mxu0 0.0
    %113 = vmatprep.subr.mxu0 0.0
    %114 = vmatpush1.msra.mxu0 0.0
    %115 = vmatprep.subr.mxu0 0.0
    %116 = vmatpush1.msra.mxu0 0.0
    %117 = vmatprep.subr.mxu0 0.0
    %118 = vmatpush1.msra.mxu0 0.0
    %119 = vmatprep.subr.mxu0 0.0
    %120 = vmatpush1.msra.mxu0 0.0
    %121 = vmatprep.subr.mxu0 0.0
    %122 = vmatpush1.msra.mxu0 0.0
    %123 = vmatprep.subr.mxu0 0.0
    %124 = vmatpush1.msra.mxu0 0.0
    %125 = vmatprep.subr.mxu0 0.0
    %126 = vmatpush1.msra.mxu0 0.0
    %127 = vmatprep.mubr.f32.mxu0 0.0
    %128 = vmatmul.mubr.f32.gmra.mrb[0].mxu0 %v58
    %v129 = vpop.f32.mrb[0].mxu0
    %v130 = vadd.f32 %v54, %v129
    %v131 = vpop.f32.mrb[0].mxu0
    %132 = vmatprep.mubr.f32.mxu0 0.0
    %133 = vmatmul.mubr.f32.gmra.mrb[0].mxu0 %v61
    %v134 = vpop.f32.mrb[0].mxu0
    %v135 = vadd.f32 %v54, %v134
    %v136 = vpop.f32.mrb[0].mxu0
    %137 = vdwg.mxu0
    %v138 = vmul.f32 %v130, 0.5
    %v139 = vmul.f32 %v135, 0.5
    %v140 = vmul.f32 %v130, 0.70710677
    %v141 = vmul.f32 %v135, 0.70710677
    %v142 = verf.f32.pop %v140
    %v143 = verf.f32.pop %v141
    %v144 = vadd.f32 %v142, 1.0
    %v145 = vadd.f32 %v143, 1.0
    %v146 = vmul.f32 %v138, %v144
    %v147 = vmul.f32 %v139, %v145
    %148 = vst [vmem:[#allocation7] sm:$0xff] %v146
    %149 = vst [vmem:[#allocation7 + $0x8] sm:$0xff] %v147
    // Predicated region
    $region22: #{_bert_intermediate_impl.1} parent=1 // pred_check
      _
    $region23: #{_bert_intermediate_impl.1} parent=1 // pred_check_branch
      %151 = sbr.rel (0) target = $region25
    $region24: #{_bert_intermediate_impl.1} parent=1 // pred_region
      %s153 = ssub.s32 256, 256
      %154 = vsyncadd [#allocation4], %s153
      %s155 = sshll.u32 [#allocation7], 4
      %s156 = int_to_ptr.vmem [resolvable:$true] %s155
      %161 = dma.vmem_to_hbm [thread:$0]  %s156, 256, %s3, [#allocation4], 128, 128, 8
    $region25: #{_bert_intermediate_impl.1} parent=1 // pred_fallthru
      _
    // Predicated region
    $region26: #{_bert_intermediate_impl.1} parent=1 // pred_check
      _
    $region27: #{_bert_intermediate_impl.1} parent=1 // pred_check_branch
      %163 = sbr.rel (0) target = $region29
    $region28: #{_bert_intermediate_impl.1} parent=1 // pred_region
      %164 = dma.done [#allocation4], 256
    $region29: #{_bert_intermediate_impl.1} parent=1 // pred_fallthru
      _
    %165 = vsyncpa [#allocation3], 1
    %166 = vsyncpa [#allocation6], 1
    %167 = vsyncpa [#allocation4], 1

// kernel: _bert_intermediate_impl.1
$region0: #{_bert_intermediate_impl.1}
  #allocation0 [shape = 'u32[]', space=smem, size = 0x4, offset = 0x4, fixed_abs, tag = 'smem constant byte address 0x4 - core index']
  #allocation1 [shape = 'u32[144,128]{1,0:T(1,128)}', space=vmem, size = 0x12000, scoped, tag = 'internal scratch']
  %s0 = inlined_call_operand.hbm [shape: f32[16,32], index: 0, kind: input, shape index: {}]
  %s1 = inlined_call_operand.hbm [shape: f32[32,128], index: 1, kind: input, shape index: {}]
  %s2 = inlined_call_operand.vmem [shape: f32[1,128], index: 2, kind: input, shape index: {}]
  %s3 = inlined_call_operand.hbm [shape: f32[16,128], index: 3, kind: output, shape index: {}]
  %s4 = sld [smem:[#allocation0]]
  $region30: #{_bert_intermediate_impl.1} parent=0
    _
  %s6 = ssub.s32 1, %s4
  %s7 = scalar_select 0, %s6, %s4
  $region1: #{_bert_intermediate_impl.1} parent=0
    #allocation2 [shape = 'u8[8192]{0}', space=vmem, size = 0x2000, scoped, tag = 'input window, operand 0, single buffered']
    #allocation3 [shape = 's32[1]{0}', space=sflag, size = 0x4, scoped, tag = 'scoped memory for _bert_intermediate_impl.1']
    #allocation4 [shape = 's32[1]{0}', space=sflag, size = 0x4, scoped, tag = 'scoped memory for _bert_intermediate_impl.1']
    #allocation5 [shape = 'u8[16384]{0}', space=vmem, size = 0x4000, scoped, tag = 'input window, operand 1, single buffered']
    #allocation6 [shape = 's32[1]{0}', space=sflag, size = 0x4, scoped, tag = 'scoped memory for _bert_intermediate_impl.1']
    #allocation7 [shape = 'u8[8192]{0}', space=vmem, size = 0x2000, scoped, tag = 'output window, operand 0, single buffered']
    %8 = vsyncpa [#allocation3], 0
    %9 = vsyncpa [#allocation6], 0
    %10 = vsyncpa [#allocation4], 0
    // Predicated region
    $region2: #{_bert_intermediate_impl.1} parent=1 // pred_check
      _
    $region3: #{_bert_intermediate_impl.1} parent=1 // pred_check_branch
      %12 = sbr.rel (0) target = $region5
    $region4: #{_bert_intermediate_impl.1} parent=1 // pred_region
      %s14 = ssub.s32 256, 256
      %15 = vsyncadd [#allocation3], %s14
      %s16 = sshll.u32 [#allocation2], 4
      %s17 = int_to_ptr.vmem [resolvable:$true] %s16
      %22 = dma.hbm_to_vmem [thread:$0]  %s0, 256, %s17, [#allocation3], 128, 128, 8
    $region5: #{_bert_intermediate_impl.1} parent=1 // pred_fallthru
      _
    // Predicated region
    $region6: #{_bert_intermediate_impl.1} parent=1 // pred_check
      _
    $region7: #{_bert_intermediate_impl.1} parent=1 // pred_check_branch
      %24 = sbr.rel (0) target = $region9
    $region8: #{_bert_intermediate_impl.1} parent=1 // pred_region
      %s26 = ssub.s32 512, 512
      %27 = vsyncadd [#allocation6], %s26
      %s28 = sshll.u32 [#allocation5], 4
      %s29 = int_to_ptr.vmem [resolvable:$true] %s28
      %34 = dma.hbm_to_vmem [thread:$0]  %s1, 512, %s29, [#allocation6], 128, 128, 8
    $region9: #{_bert_intermediate_impl.1} parent=1 // pred_fallthru
      _
    // Predicated region
    $region10: #{_bert_intermediate_impl.1} parent=1 // pred_check
      _
    $region11: #{_bert_intermediate_impl.1} parent=1 // pred_check_branch
      %36 = sbr.rel (0) target = $region13
    $region12: #{_bert_intermediate_impl.1} parent=1 // pred_region
      _
    $region13: #{_bert_intermediate_impl.1} parent=1 // pred_fallthru
      _
    // Predicated region
    $region14: #{_bert_intermediate_impl.1} parent=1 // pred_check
      _
    $region15: #{_bert_intermediate_impl.1} parent=1 // pred_check_branch
      %38 = sbr.rel (0) target = $region17
    $region16: #{_bert_intermediate_impl.1} parent=1 // pred_region
      %39 = dma.done [#allocation3], 256
    $region17: #{_bert_intermediate_impl.1} parent=1 // pred_fallthru
      _
    // Predicated region
    $region18: #{_bert_intermediate_impl.1} parent=1 // pred_check
      _
    $region19: #{_bert_intermediate_impl.1} parent=1 // pred_check_branch
      %41 = sbr.rel (0) target = $region21
    $region20: #{_bert_intermediate_impl.1} parent=1 // pred_region
      %42 = dma.done [#allocation6], 512
    $region21: #{_bert_intermediate_impl.1} parent=1 // pred_fallthru
      _
    %v43 = vld [vmem:[#allocation2] sm:$0xff]
    %v44 = vld [vmem:[#allocation2 + $0x8] sm:$0xff]
    %v45 = vld [vmem:[#allocation5] sm:$0xff]
    %v46 = vld [vmem:[#allocation5 + $0x8] sm:$0xff]
    %v47 = vld [vmem:[#allocation5 + $0x10] sm:$0xff]
    %v48 = vld [vmem:[#allocation5 + $0x18] sm:$0xff]
    %v49 = vld [vmem:[%s2] sm:$0x1]
    %v51 = vlaneseq
    %v52 = vshrl.u32 %v51, 7
    %v53 = vsub.s32 0, %v52
    %v54 = vrot.slane %v49, %v53
    %vm56 = vcmask 261120
    %v58 = vsel %vm56, %v43, 0
    %v61 = vsel %vm56, %v44, 0
    %63 = vmatprep.subr.mxu0 0.0
    %64 = vmatpush1.msra.mxu0 %v45
    %65 = vmatprep.subr.mxu0 0.0
    %66 = vmatpush1.msra.mxu0 %v46
    %67 = vmatprep.subr.mxu0 0.0
    %68 = vmatpush1.msra.mxu0 %v47
    %69 = vmatprep.subr.mxu0 0.0
    %70 = vmatpush1.msra.mxu0 %v48
    %71 = vmatprep.subr.mxu0 0.0
    %72 = vmatpush1.msra.mxu0 0.0
    %73 = vmatprep.subr.mxu0 0.0
    %74 = vmatpush1.msra.mxu0 0.0
    %75 = vmatprep.subr.mxu0 0.0
    %76 = vmatpush1.msra.mxu0 0.0
    %77 = vmatprep.subr.mxu0 0.0
    %78 = vmatpush1.msra.mxu0 0.0
    %79 = vmatprep.subr.mxu0 0.0
    %80 = vmatpush1.msra.mxu0 0.0
    %81 = vmatprep.subr.mxu0 0.0
    %82 = vmatpush1.msra.mxu0 0.0
    %83 = vmatprep.subr.mxu0 0.0
    %84 = vmatpush1.msra.mxu0 0.0
    %85 = vmatprep.subr.mxu0 0.0
    %86 = vmatpush1.msra.mxu0 0.0
    %87 = vmatprep.subr.mxu0 0.0
    %88 = vmatpush1.msra.mxu0 0.0
    %89 = vmatprep.subr.mxu0 0.0
    %90 = vmatpush1.msra.mxu0 0.0
    %91 = vmatprep.subr.mxu0 0.0
    %92 = vmatpush1.msra.mxu0 0.0
    %93 = vmatprep.subr.mxu0 0.0
    %94 = vmatpush1.msra.mxu0 0.0
    %95 = vmatprep.subr.mxu0 0.0
    %96 = vmatpush1.msra.mxu0 0.0
    %97 = vmatprep.subr.mxu0 0.0
    %98 = vmatpush1.msra.mxu0 0.0
    %99 = vmatprep.subr.mxu0 0.0
    %100 = vmatpush1.msra.mxu0 0.0
    %101 = vmatprep.subr.mxu0 0.0
    %102 = vmatpush1.msra.mxu0 0.0
    %103 = vmatprep.subr.mxu0 0.0
    %104 = vmatpush1.msra.mxu0 0.0
    %105 = vmatprep.subr.mxu0 0.0
    %106 = vmatpush1.msra.mxu0 0.0
    %107 = vmatprep.subr.mxu0 0.0
    %108 = vmatpush1.msra.mxu0 0.0
    %109 = vmatprep.subr.mxu0 0.0
    %110 = vmatpush1.msra.mxu0 0.0
    %111 = vmatprep.subr.mxu0 0.0
    %112 = vmatpush1.msra.mxu0 0.0
    %113 = vmatprep.subr.mxu0 0.0
    %114 = vmatpush1.msra.mxu0 0.0
    %115 = vmatprep.subr.mxu0 0.0
    %116 = vmatpush1.msra.mxu0 0.0
    %117 = vmatprep.subr.mxu0 0.0
    %118 = vmatpush1.msra.mxu0 0.0
    %119 = vmatprep.subr.mxu0 0.0
    %120 = vmatpush1.msra.mxu0 0.0
    %121 = vmatprep.subr.mxu0 0.0
    %122 = vmatpush1.msra.mxu0 0.0
    %123 = vmatprep.subr.mxu0 0.0
    %124 = vmatpush1.msra.mxu0 0.0
    %125 = vmatprep.subr.mxu0 0.0
    %126 = vmatpush1.msra.mxu0 0.0
    %127 = vmatprep.mubr.f32.mxu0 0.0
    %128 = vmatmul.mubr.f32.gmra.mrb[0].mxu0 %v58
    %v129 = vpop.f32.mrb[0].mxu0
    %v130 = vadd.f32 %v54, %v129
    %v131 = vpop.f32.mrb[0].mxu0
    %132 = vmatprep.mubr.f32.mxu0 0.0
    %133 = vmatmul.mubr.f32.gmra.mrb[0].mxu0 %v61
    %v134 = vpop.f32.mrb[0].mxu0
    %v135 = vadd.f32 %v54, %v134
    %v136 = vpop.f32.mrb[0].mxu0
    %137 = vdwg.mxu0
    %v138 = vmul.f32 %v130, 0.5
    %v139 = vmul.f32 %v135, 0.5
    %v140 = vmul.f32 %v130, 0.70710677
    %v141 = vmul.f32 %v135, 0.70710677
    %v142 = verf.f32.pop %v140
    %v143 = verf.f32.pop %v141
    %v144 = vadd.f32 %v142, 1.0
    %v145 = vadd.f32 %v143, 1.0
    %v146 = vmul.f32 %v138, %v144
    %v147 = vmul.f32 %v139, %v145
    %148 = vst [vmem:[#allocation7] sm:$0xff] %v146
    %149 = vst [vmem:[#allocation7 + $0x8] sm:$0xff] %v147
    // Predicated region
    $region22: #{_bert_intermediate_impl.1} parent=1 // pred_check
      _
    $region23: #{_bert_intermediate_impl.1} parent=1 // pred_check_branch
      %151 = sbr.rel (0) target = $region25
    $region24: #{_bert_intermediate_impl.1} parent=1 // pred_region
      %s153 = ssub.s32 256, 256
      %154 = vsyncadd [#allocation4], %s153
      %s155 = sshll.u32 [#allocation7], 4
      %s156 = int_to_ptr.vmem [resolvable:$true] %s155
      %161 = dma.vmem_to_hbm [thread:$0]  %s156, 256, %s3, [#allocation4], 128, 128, 8
    $region25: #{_bert_intermediate_impl.1} parent=1 // pred_fallthru
      _
    // Predicated region
    $region26: #{_bert_intermediate_impl.1} parent=1 // pred_check
      _
    $region27: #{_bert_intermediate_impl.1} parent=1 // pred_check_branch
      %163 = sbr.rel (0) target = $region29
    $region28: #{_bert_intermediate_impl.1} parent=1 // pred_region
      %164 = dma.done [#allocation4], 256
    $region29: #{_bert_intermediate_impl.1} parent=1 // pred_fallthru
      _
    %165 = vsyncpa [#allocation3], 1
    %166 = vsyncpa [#allocation6], 1
    %167 = vsyncpa [#allocation4], 1

</llo_original>
